<compile_context>
chip_gen: v7x
topology: tpu7x:2x2x1
jax: 0.10.0
libtpu: 0.0.40
codegen_flags: <defaults>
</compile_context>

<pallas_src>
import itertools
from functools import partial

import numpy as np

import jax
import jax.numpy as jnp
from jax.experimental import pallas as pl
from jax.experimental.pallas import tpu as pltpu

try:  # optional; falls back to exact brute force for tiny sizes
    from scipy.optimize import linear_sum_assignment as _scipy_lsa
except Exception:  # pragma: no cover
    _scipy_lsa = None

# ----------------------------- constants -----------------------------------
MATCH_ALPHA = 0.25        # matcher focal alpha (hard-coded in the reference)
FOCAL_ALPHA = 0.25        # loss focal alpha default
LANE = 128
SUBLANE_BF16 = 16         # bf16 native sublane tile
PAD_LOGIT = -1e4          # sigmoid(PAD_LOGIT) == 0 -> padded rows/lanes contribute 0


def _round_up(x, m):
    return ((x + m - 1) // m) * m


def _choose_tq(BQ):
    """Row-block size: <=512 rows, multiple of 16 (bf16 sublane), minimal BQp padding,
    and >=2 row blocks when BQ is large enough so v7x megacore gets even work."""
    nb = -(-BQ // 512)
    if nb == 1 and BQ >= 64:
        nb = 2
    return _round_up(-(-BQ // nb), SUBLANE_BF16)


def _vmem_limit_bytes(*block_nbytes):
    # double-buffered streams + headroom, clamped to a safe scoped-VMEM range
    need = 2 * sum(int(b) for b in block_nbytes) + (4 << 20)
    return int(min(64 << 20, max(16 << 20, need)))


# ----------------------------- Pallas kernels ------------------------------
def _cost_kernel(cost_class_w, cost_point_w,
                 logits_ref, pts_ref, onehot_ref, sel_ref, tgt_ref, out_ref):
    # grid = (L, BQp // TQ); every block independent.
    # logits_ref : (1, TQ, Cp)  bf16 padded logits (pad value PAD_LOGIT)
    # pts_ref    : (1, TQ, 4)   f32 predicted points
    # onehot_ref : (Cp, Tp)     bf16 one_hot(tgt_ids).T  (gather-as-matmul on MXU)
    # sel_ref    : (4, 4*Tp)    f32: sel[d, d*Tp:(d+1)*Tp] = 1 -> coord lane-broadcast via MXU
    # tgt_ref    : (1, 4*Tp)    f32 target coords laid out at [d*Tp + t] (sublane broadcast)
    # out_ref    : (1, TQ, Tp)  f32 lane-dense cost matrix

    # --- gather-then-transform: pick the target-class logit per (query, target) ---
    x_t = jnp.dot(logits_ref[0], onehot_ref[...],
                  preferred_element_type=jnp.float32)            # (TQ, Tp) f32
    e = jnp.exp(-jnp.abs(x_t))                                   # shared transcendental
    lg = jnp.log1p(e)
    sp_pos = jnp.maximum(x_t, 0.0) + lg                          # -log(1 - sigmoid(x))
    sp_neg = sp_pos - x_t                                        # -log(sigmoid(x))
    r = pl.reciprocal(1.0 + e, approx=True)
    prob = jnp.where(x_t >= 0.0, r, 1.0 - r)                     # sigmoid(x_t)
    one_m = 1.0 - prob
    cost_class = (MATCH_ALPHA * (one_m * one_m) * sp_neg
                  - (1.0 - MATCH_ALPHA) * (prob * prob) * sp_pos)  # gamma == 2 -> mul

    # --- L1 cdist: broadcast each predicted coord across lanes with one MXU matmul,
    # subtract the sublane-broadcast target row, |.|, add the 4 aligned slices. ---
    pts = pts_ref[0]                                             # (TQ, 4) f32
    bcast = jnp.dot(pts, sel_ref[...],
                    preferred_element_type=jnp.float32)          # (TQ, 4*Tp)
    adiff = jnp.abs(bcast - tgt_ref[...])
    tp = out_ref.shape[-1]
    cost_point = (adiff[:, 0 * tp:1 * tp] + adiff[:, 1 * tp:2 * tp] +
                  adiff[:, 2 * tp:3 * tp] + adiff[:, 3 * tp:4 * tp])

    out_ref[0] = cost_class_w * cost_class + cost_point_w * cost_point


def _loss_kernel(focal_alpha, logits_ref, tc_ref, focal_ref):
    # grid = (L, BQp // TQ); row axis is a reduction -> ("parallel", "arbitrary").
    # logits_ref : (1, TQ, Cp)  bf16 padded logits (pad value PAD_LOGIT -> contributes 0)
    # tc_ref     : (1, TQ, 1)   int32 target class per row (-1 -> zero one-hot row)
    # focal_ref  : (1, 1, Cp)   lane partial sums of the focal loss (accumulated over rows)
    row_blk = pl.program_id(1)
    x = logits_ref[0].astype(jnp.float32)                        # (TQ, Cp)
    tc = tc_ref[0]                                               # (TQ, 1) int32
    iota = jax.lax.broadcasted_iota(jnp.int32, x.shape, 1)
    t = (iota == tc).astype(jnp.float32)                         # in-kernel one-hot

    e = jnp.exp(-jnp.abs(x))                                     # shared transcendental
    lg = jnp.log1p(e)
    rcp = pl.reciprocal(1.0 + e, approx=True)
    prob = jnp.where(x >= 0.0, rcp, 1.0 - rcp)                   # sigmoid(x)
    ce = jnp.maximum(x, 0.0) - x * t + lg                        # stable BCE-with-logits
    p_t = prob * t + (1.0 - prob) * (1.0 - t)
    omp = 1.0 - p_t
    alpha_t = focal_alpha * t + (1.0 - focal_alpha) * (1.0 - t)
    loss = alpha_t * ce * (omp * omp)                            # gamma == 2 -> mul

    @pl.when(row_blk == 0)
    def _init():
        focal_ref[...] = jnp.zeros_like(focal_ref)

    focal_ref[0] += jnp.sum(loss, axis=0, keepdims=True)         # lane-dense partials


# ----------------------------- kernel wrappers ------------------------------
def compute_cost_matrices(logits_p, pts_p, onehot_t, sel4, tgt_flat,
                          cost_class_w, cost_point_w, tq):
    L, BQp, Cp = logits_p.shape
    Tp = onehot_t.shape[1]
    block_bytes = (tq * Cp * 2, tq * 4 * 4, Cp * Tp * 2,
                   4 * 4 * Tp * 4, 4 * Tp * 4, tq * Tp * 4)
    kernel = partial(_cost_kernel, float(cost_class_w), float(cost_point_w))
    return pl.pallas_call(
        kernel,
        out_shape=jax.ShapeDtypeStruct((L, BQp, Tp), jnp.float32),
        grid=(L, BQp // tq),
        in_specs=[
            pl.BlockSpec((1, tq, Cp), lambda l, r: (l, r, 0)),
            pl.BlockSpec((1, tq, 4), lambda l, r: (l, r, 0)),
            pl.BlockSpec((Cp, Tp), lambda l, r: (0, 0)),
            pl.BlockSpec((4, 4 * Tp), lambda l, r: (0, 0)),
            pl.BlockSpec((1, 4 * Tp), lambda l, r: (0, 0)),
        ],
        out_specs=pl.BlockSpec((1, tq, Tp), lambda l, r: (l, r, 0)),
        compiler_params=pltpu.CompilerParams(
            dimension_semantics=("parallel", "parallel"),
            vmem_limit_bytes=_vmem_limit_bytes(*block_bytes)),
    )(logits_p, pts_p, onehot_t, sel4, tgt_flat)


def compute_focal_sums(logits_p, tc_p, focal_alpha, tq):
    L, BQp, Cp = logits_p.shape
    block_bytes = (tq * Cp * 2, tq * 4, Cp * 4)
    kernel = partial(_loss_kernel, float(focal_alpha))
    focal_part = pl.pallas_call(
        kernel,
        out_shape=jax.ShapeDtypeStruct((L, 1, Cp), jnp.float32),
        grid=(L, BQp // tq),
        in_specs=[
            pl.BlockSpec((1, tq, Cp), lambda l, r: (l, r, 0)),
            pl.BlockSpec((1, tq, 1), lambda l, r: (l, r, 0)),
        ],
        out_specs=pl.BlockSpec((1, 1, Cp), lambda l, r: (l, 0, 0)),
        compiler_params=pltpu.CompilerParams(
            dimension_semantics=("parallel", "arbitrary"),
            vmem_limit_bytes=_vmem_limit_bytes(*block_bytes)),
    )(logits_p, tc_p)
    # final (tiny) cross-lane reduction once, outside the hot loop
    return jnp.sum(focal_part.reshape(L, Cp), axis=-1)


def _pad_predictions(logits_stack, points_stack):
    # [L, B, Q, C] / [L, B, Q, 4] -> lane/sublane-friendly padded, flattened arrays.
    # Logits are stored bf16 (read by BOTH kernels -> halves the dominant HBM stream);
    # points stay f32 (tiny stream, keeps the L1 cost exact).
    L, B, Q, C = logits_stack.shape
    BQ = B * Q
    Cp = _round_up(max(C, 1), LANE)
    tq = _choose_tq(BQ)
    BQp = _round_up(BQ, tq)
    logits_p = jnp.full((L, BQp, Cp), PAD_LOGIT, jnp.bfloat16)
    logits_p = logits_p.at[:, :BQ, :C].set(
        logits_stack.reshape(L, BQ, C).astype(jnp.bfloat16))
    pts_p = jnp.zeros((L, BQp, 4), jnp.float32)
    pts_p = pts_p.at[:, :BQ, :].set(
        points_stack.reshape(L, BQ, 4).astype(jnp.float32))
    return logits_p, pts_p, tq


# ----------------------------- host-side assignment --------------------------
def _linear_sum_assignment(cost):
    """Exact assignment for a tall [num_queries, num_targets] cost matrix."""
    nq, nt = cost.shape
    if nt == 0:
        return np.zeros((0,), np.int64), np.zeros((0,), np.int64)
    if _scipy_lsa is not None:
        rows, cols = _scipy_lsa(cost)
        return np.asarray(rows, np.int64), np.asarray(cols, np.int64)
    # brute force fallback (fine for tiny synthetic sizes)
    best_rows, best_cost = None, np.inf
    for perm in itertools.permutations(range(nq), nt):
        c = sum(cost[perm[j], j] for j in range(nt))
        if c < best_cost:
            best_cost, best_rows = c, perm
    rows = np.asarray(best_rows, np.int64)
    cols = np.arange(nt, dtype=np.int64)
    order = np.argsort(rows)
    return rows[order], cols[order]


class HungarianMatcher:
    def __init__(self, cost_class=1.0, cost_point=1.0, cost_giou=1.0):
        assert cost_class != 0 or cost_point != 0, "all costs cant be 0"
        self.cost_class = cost_class
        self.cost_point = cost_point

    def match_all(self, logits_p, pts_p, targets, *, B, Q, tq):
        """Match ALL decoder layers with ONE fused Pallas launch and ONE host sync."""
        L, BQp, Cp = logits_p.shape
        BQ = B * Q

        sizes = [int(t["points"].shape[0]) for t in targets]
        T = sum(sizes)
        Tp = _round_up(max(T, 1), LANE)

        if T:
            tgt_ids = jnp.concatenate([t["labels"] for t in targets], axis=0)
            tgt_pts = jnp.concatenate([t["points"] for t in targets],
                                      axis=0).astype(jnp.float32)
        else:
            tgt_ids = jnp.zeros((0,), jnp.int32)
            tgt_pts = jnp.zeros((0, 4), jnp.float32)

        onehot_t = jnp.zeros((Cp, Tp), jnp.float32)
        if T:
            onehot_t = onehot_t.at[:, :T].set(
                jax.nn.one_hot(tgt_ids, Cp, dtype=jnp.float32).T)
        onehot_t = onehot_t.astype(jnp.bfloat16)          # exact 0/1; MXU-friendly

        tgt_flat = jnp.zeros((4, Tp), jnp.float32)
        if T:
            tgt_flat = tgt_flat.at[:, :T].set(tgt_pts.T)
        tgt_flat = tgt_flat.reshape(1, 4 * Tp)
        sel4 = jnp.broadcast_to(jnp.eye(4, dtype=jnp.float32)[:, :, None],
                                (4, 4, Tp)).reshape(4, 4 * Tp)

        C_all = compute_cost_matrices(logits_p, pts_p, onehot_t, sel4, tgt_flat,
                                      self.cost_class, self.cost_point, tq)
        # device-side slice drops ALL row/target padding before the only D2H copy
        C_host = np.asarray(jax.device_get(C_all[:, :BQ, :T]))

        all_indices = []
        for l in range(L):
            Cl = C_host[l].reshape(B, Q, T)
            indices, start = [], 0
            for i, sz in enumerate(sizes):
                sub = Cl[i, :, start:start + sz]
                indices.append(_linear_sum_assignment(sub))
                start += sz
            all_indices.append(indices)
        return all_indices

    def __call__(self, outputs, targets):
        # single-layer convenience path (API parity with the PyTorch module)
        B, Q, C = outputs["pred_logits"].shape
        logits_p, pts_p, tq = _pad_predictions(outputs["pred_logits"][None],
                                               outputs["pred_points"][None])
        return self.match_all(logits_p, pts_p, targets, B=B, Q=Q, tq=tq)[0]


# ----------------------------- SetCriterion ---------------------------------
class SetCriterion:
    def __init__(self, num_classes, matcher, weight_dict, focal_alpha, losses):
        self.num_classes = num_classes
        self.matcher = matcher
        self.weight_dict = weight_dict
        self.focal_alpha = focal_alpha
        self.losses = losses

    def forward(self, outputs, targets):
        # layer 0 = main output, layers 1.. = aux_outputs
        layer_outs = [{k: v for k, v in outputs.items() if k != "aux_outputs"}]
        layer_outs += list(outputs.get("aux_outputs", []))
        L = len(layer_outs)

        logits_stack = jnp.stack([o["pred_logits"] for o in layer_outs], axis=0)  # [L,B,Q,C]
        points_stack = jnp.stack([o["pred_points"] for o in layer_outs], axis=0)  # [L,B,Q,4]
        B, Q, C = layer_outs[0]["pred_logits"].shape
        BQ = B * Q

        logits_p, pts_p, tq = _pad_predictions(logits_stack, points_stack)
        _, BQp, Cp = logits_p.shape

        # ---- 1) matching for all layers: one kernel launch, one host sync ----
        all_indices = self.matcher.match_all(logits_p, pts_p, targets, B=B, Q=Q, tq=tq)

        sizes = [int(t["labels"].shape[0]) for t in targets]
        num_points = max(float(sum(sizes)), 1.0)           # world_size == 1, clamp >= 1
        labels_np = [np.asarray(jax.device_get(t["labels"])) for t in targets]
        offsets = np.cumsum([0] + sizes)
        M = sum(min(Q, s) for s in sizes)

        # ---- 2) host-side index bookkeeping (tiny) ----
        # -1 -> zero one-hot row inside the loss kernel (matches "no-object" / padded rows)
        target_classes_np = np.full((L, BQp), -1, np.int32)
        src_idx_np = np.zeros((L, M), np.int32)
        tgt_idx_np = np.zeros((L, M), np.int32)
        tco_np = np.zeros((L, M), np.int32)
        for l, indices in enumerate(all_indices):
            srcs, tgts, tcos = [], [], []
            for i, (rows, cols) in enumerate(indices):
                srcs.append(i * Q + rows)
                tgts.append(offsets[i] + cols)
                tcos.append(labels_np[i][cols])
            if M:
                src = np.concatenate(srcs).astype(np.int32)
                tgt = np.concatenate(tgts).astype(np.int32)
                tco = np.concatenate(tcos).astype(np.int32)
                target_classes_np[l, src] = tco
                src_idx_np[l] = src
                tgt_idx_np[l] = tgt
                tco_np[l] = tco

        # ---- 3) fused focal-loss kernel (bf16 logits + int32 class index per row) ----
        tc_p = jnp.asarray(target_classes_np).reshape(L, BQp, 1)
        focal_total = compute_focal_sums(logits_p, tc_p, self.focal_alpha, tq)
        loss_ce = focal_total / num_points          # == sigmoid_focal_loss(...) * Q

        # ---- 4) matched-L1 point loss: tiny -> plain XLA (per perf review) ----
        pts_flat = points_stack.reshape(L, BQ, 4).astype(jnp.float32)
        if sum(sizes):
            tgt_pts = jnp.concatenate([t["points"] for t in targets],
                                      axis=0).astype(jnp.float32)
        else:
            tgt_pts = jnp.zeros((0, 4), jnp.float32)
        src_idx = jnp.asarray(src_idx_np)
        tgt_idx = jnp.asarray(tgt_idx_np)
        lsel = jnp.arange(L)[:, None]
        src_pts_m = pts_flat[lsel, src_idx]                                       # [L,M,4]
        tgt_pts_m = tgt_pts[tgt_idx]                                              # [L,M,4]
        loss_point = jnp.sum(jnp.abs(src_pts_m - tgt_pts_m), axis=(1, 2)) / num_points

        # cardinality (logging metric) and class_error: tiny argmax work, plain XLA
        tgt_lengths = jnp.asarray(sizes, jnp.float32)
        card_pred = jnp.sum((jnp.argmax(logits_stack, axis=-1) != C - 1)
                            .astype(jnp.float32), axis=2)                         # [L,B]
        card_err = jnp.mean(jnp.abs(card_pred - tgt_lengths[None, :]), axis=1)    # [L]

        logits_flat = logits_stack.reshape(L, BQ, C).astype(jnp.float32)
        if M:
            matched_logits = logits_flat[0][src_idx[0]]                           # [M,C]
            pred = jnp.argmax(matched_logits, axis=-1)
            acc = jnp.mean((pred == jnp.asarray(tco_np[0])).astype(jnp.float32)) * 100.0
            class_error = 100.0 - acc
        else:
            class_error = jnp.asarray(100.0, jnp.float32)

        losses = {}
        for l in range(L):
            sfx = "" if l == 0 else f"_{l - 1}"
            if "labels" in self.losses:
                losses["loss_ce" + sfx] = loss_ce[l]
                if l == 0:
                    losses["class_error"] = class_error
            if "cardinality" in self.losses:
                losses["cardinality_error" + sfx] = card_err[l]
            if "points" in self.losses:
                losses["loss_point" + sfx] = loss_point[l]
        # TODO(synk): 'masks' loss (nested tensors + bilinear interpolate) not implemented.
        return losses


# ----------------------------- main ------------------------------------------
if __name__ == "__main__":
    B, Q, NUM_CLASSES = 2, 8, 4
    NUM_AUX = 2
    key = jax.random.PRNGKey(0)
    keys = jax.random.split(key, 8)

    def rand_layer(k):
        k1, k2 = jax.random.split(k)
        return {"pred_logits": jax.random.normal(k1, (B, Q, NUM_CLASSES), dtype=jnp.float32),
                "pred_points": jax.random.uniform(k2, (B, Q, 4), dtype=jnp.float32)}

    outputs = rand_layer(keys[0])
    outputs["aux_outputs"] = [rand_layer(keys[1 + i]) for i in range(NUM_AUX)]

    targets = [
        {"labels": jax.random.randint(keys[4], (3,), 0, NUM_CLASSES),
         "points": jax.random.uniform(keys[5], (3, 4), dtype=jnp.float32)},
        {"labels": jax.random.randint(keys[6], (2,), 0, NUM_CLASSES),
         "points": jax.random.uniform(keys[7], (2, 4), dtype=jnp.float32)},
    ]

    matcher = HungarianMatcher(cost_class=1.0, cost_point=1.0)
    criterion = SetCriterion(
        num_classes=NUM_CLASSES,
        matcher=matcher,
        weight_dict={"loss_ce": 2.0, "loss_point": 5.0},
        focal_alpha=FOCAL_ALPHA,
        losses=["labels", "cardinality", "points"],
    )

    losses = criterion.forward(outputs, targets)
    losses = {k: jax.block_until_ready(v) for k, v in losses.items()}
    _ = {k: float(v) for k, v in losses.items()}  # force host values
    print("KERNEL_OK")
</pallas_src>

<mosaic_0001>
module attributes {stable_mosaic.version = 11 : i64} {
  func.func @_cost_kernel(%arg0: i32, %arg1: i32, %arg2: memref<1x16x128xbf16, #tpu.memory_space<vmem>>, %arg3: memref<1x16x4xf32, #tpu.memory_space<vmem>>, %arg4: memref<128x128xbf16, #tpu.memory_space<vmem>>, %arg5: memref<4x512xf32, #tpu.memory_space<vmem>>, %arg6: memref<1x512xf32, #tpu.memory_space<vmem>>, %arg7: memref<1x16x128xf32, #tpu.memory_space<vmem>>) attributes {dimension_semantics = [#tpu.dimension_semantics<parallel>, #tpu.dimension_semantics<parallel>], iteration_bounds = array<i64: 3, 1>, scalar_prefetch = 0 : i64, scratch_operands = 0 : i64, tpu.core_type = #tpu.core_type<tc>, window_params = [{transform_indices = @transform_0, window_bounds = array<i64: 1, 16, 128>}, {transform_indices = @transform_1, window_bounds = array<i64: 1, 16, 4>}, {pipeline_mode = #tpu.pipeline_mode<synchronous>, transform_indices = @transform_2, window_bounds = array<i64: 128, 128>}, {pipeline_mode = #tpu.pipeline_mode<synchronous>, transform_indices = @transform_3, window_bounds = array<i64: 4, 512>}, {pipeline_mode = #tpu.pipeline_mode<synchronous>, transform_indices = @transform_4, window_bounds = array<i64: 1, 512>}, {transform_indices = @transform_5, window_bounds = array<i64: 1, 16, 128>}]} {
    %c0 = arith.constant 0 : index
    %c0_0 = arith.constant 0 : index
    %c0_1 = arith.constant 0 : index
    %0 = vector.load %arg2[%c0, %c0_0, %c0_1] : memref<1x16x128xbf16, #tpu.memory_space<vmem>>, vector<1x16x128xbf16>
    %1 = vector.shape_cast %0 : vector<1x16x128xbf16> to vector<16x128xbf16>
    %c0_2 = arith.constant 0 : index
    %c0_3 = arith.constant 0 : index
    %2 = vector.load %arg4[%c0_2, %c0_3] : memref<128x128xbf16, #tpu.memory_space<vmem>>, vector<128x128xbf16>
    %cst = arith.constant dense<0.000000e+00> : vector<16x128xf32>
    %3 = tpu.matmul %1, %2, %cst {dimension_numbers = #tpu.dot_dimension_numbers<[1], [0], [0], [1], [0, 0, 1, 1], [], []>} : vector<16x128xbf16>, vector<128x128xbf16>, vector<16x128xf32> -> vector<16x128xf32>
    %4 = math.absf %3 : vector<16x128xf32>
    %cst_4 = arith.constant 0.000000e+00 : f32
    %5 = vector.broadcast %cst_4 : f32 to vector<16x128xf32>
    %6 = arith.subf %5, %4 : vector<16x128xf32>
    %7 = math.exp %6 : vector<16x128xf32>
    %8 = math.log1p %7 : vector<16x128xf32>
    %cst_5 = arith.constant 0.000000e+00 : f32
    %9 = vector.broadcast %cst_5 : f32 to vector<16x128xf32>
    %10 = arith.maximumf %3, %9 : vector<16x128xf32>
    %11 = arith.addf %10, %8 : vector<16x128xf32>
    %12 = arith.subf %11, %3 : vector<16x128xf32>
    %cst_6 = arith.constant 1.000000e+00 : f32
    %13 = vector.broadcast %cst_6 : f32 to vector<16x128xf32>
    %14 = arith.addf %13, %7 : vector<16x128xf32>
    %15 = tpu.reciprocal %14 {approx = true} : vector<16x128xf32> -> vector<16x128xf32>
    %cst_7 = arith.constant 0.000000e+00 : f32
    %16 = vector.broadcast %cst_7 : f32 to vector<16x128xf32>
    %17 = arith.cmpf oge, %3, %16 : vector<16x128xf32>
    %cst_8 = arith.constant 1.000000e+00 : f32
    %18 = vector.broadcast %cst_8 : f32 to vector<16x128xf32>
    %19 = arith.subf %18, %15 : vector<16x128xf32>
    %20 = arith.select %17, %15, %19 : vector<16x128xi1>, vector<16x128xf32>
    %cst_9 = arith.constant 1.000000e+00 : f32
    %21 = vector.broadcast %cst_9 : f32 to vector<16x128xf32>
    %22 = arith.subf %21, %20 : vector<16x128xf32>
    %23 = arith.mulf %22, %22 : vector<16x128xf32>
    %cst_10 = arith.constant 2.500000e-01 : f32
    %24 = vector.broadcast %cst_10 : f32 to vector<16x128xf32>
    %25 = arith.mulf %24, %23 : vector<16x128xf32>
    %26 = arith.mulf %25, %12 : vector<16x128xf32>
    %27 = arith.mulf %20, %20 : vector<16x128xf32>
    %cst_11 = arith.constant 7.500000e-01 : f32
    %28 = vector.broadcast %cst_11 : f32 to vector<16x128xf32>
    %29 = arith.mulf %28, %27 : vector<16x128xf32>
    %30 = arith.mulf %29, %11 : vector<16x128xf32>
    %31 = arith.subf %26, %30 : vector<16x128xf32>
    %c0_12 = arith.constant 0 : index
    %c0_13 = arith.constant 0 : index
    %c0_14 = arith.constant 0 : index
    %32 = vector.load %arg3[%c0_12, %c0_13, %c0_14] : memref<1x16x4xf32, #tpu.memory_space<vmem>>, vector<1x16x4xf32>
    %33 = vector.shape_cast %32 : vector<1x16x4xf32> to vector<16x4xf32>
    %c0_15 = arith.constant 0 : index
    %c0_16 = arith.constant 0 : index
    %34 = vector.load %arg5[%c0_15, %c0_16] : memref<4x512xf32, #tpu.memory_space<vmem>>, vector<4x512xf32>
    %cst_17 = arith.constant dense<0.000000e+00> : vector<16x512xf32>
    %35 = tpu.matmul %33, %34, %cst_17 {dimension_numbers = #tpu.dot_dimension_numbers<[1], [0], [0], [1], [0, 0, 1, 1], [], []>} : vector<16x4xf32>, vector<4x512xf32>, vector<16x512xf32> -> vector<16x512xf32>
    %c0_18 = arith.constant 0 : index
    %c0_19 = arith.constant 0 : index
    %36 = vector.load %arg6[%c0_18, %c0_19] : memref<1x512xf32, #tpu.memory_space<vmem>>, vector<1x512xf32>
    %37 = vector.broadcast %36 : vector<1x512xf32> to vector<16x512xf32>
    %38 = arith.subf %35, %37 : vector<16x512xf32>
    %39 = math.absf %38 : vector<16x512xf32>
    %40 = vector.extract_strided_slice %39 {offsets = [0, 0], sizes = [16, 128], strides = [1, 1]} : vector<16x512xf32> to vector<16x128xf32>
    %41 = vector.extract_strided_slice %39 {offsets = [0, 128], sizes = [16, 128], strides = [1, 1]} : vector<16x512xf32> to vector<16x128xf32>
    %42 = arith.addf %40, %41 : vector<16x128xf32>
    %43 = vector.extract_strided_slice %39 {offsets = [0, 256], sizes = [16, 128], strides = [1, 1]} : vector<16x512xf32> to vector<16x128xf32>
    %44 = arith.addf %42, %43 : vector<16x128xf32>
    %45 = vector.extract_strided_slice %39 {offsets = [0, 384], sizes = [16, 128], strides = [1, 1]} : vector<16x512xf32> to vector<16x128xf32>
    %46 = arith.addf %44, %45 : vector<16x128xf32>
    %cst_20 = arith.constant 1.000000e+00 : f32
    %47 = vector.broadcast %cst_20 : f32 to vector<16x128xf32>
    %48 = arith.mulf %47, %31 : vector<16x128xf32>
    %cst_21 = arith.constant 1.000000e+00 : f32
    %49 = vector.broadcast %cst_21 : f32 to vector<16x128xf32>
    %50 = arith.mulf %49, %46 : vector<16x128xf32>
    %51 = arith.addf %48, %50 : vector<16x128xf32>
    %c0_22 = arith.constant 0 : index
    %c0_23 = arith.constant 0 : index
    %c0_24 = arith.constant 0 : index
    %52 = vector.load %arg7[%c0_22, %c0_23, %c0_24] : memref<1x16x128xf32, #tpu.memory_space<vmem>>, vector<1x16x128xf32>
    %53 = vector.shape_cast %52 : vector<1x16x128xf32> to vector<16x128xf32>
    %54 = vector.shape_cast %51 : vector<16x128xf32> to vector<1x16x128xf32>
    tpu.vector_store %arg7[%c0_22, %c0_23, %c0_24], %54 {strides = array<i32>} : memref<1x16x128xf32, #tpu.memory_space<vmem>>, vector<1x16x128xf32>,
    return
  }
  func.func @transform_0(%arg0: i32, %arg1: i32) -> (i32, i32, i32) {
    %c0_i32 = arith.constant 0 : i32
    %c0_i32_0 = arith.constant 0 : i32
    return %arg0, %arg1, %c0_i32 : i32, i32, i32
  }
  func.func @transform_1(%arg0: i32, %arg1: i32) -> (i32, i32, i32) {
    %c0_i32 = arith.constant 0 : i32
    %c0_i32_0 = arith.constant 0 : i32
    return %arg0, %arg1, %c0_i32 : i32, i32, i32
  }
  func.func @transform_2(%arg0: i32, %arg1: i32) -> (i32, i32) {
    %c0_i32 = arith.constant 0 : i32
    %c0_i32_0 = arith.constant 0 : i32
    %c0_i32_1 = arith.constant 0 : i32
    return %c0_i32, %c0_i32_0 : i32, i32
  }
  func.func @transform_3(%arg0: i32, %arg1: i32) -> (i32, i32) {
    %c0_i32 = arith.constant 0 : i32
    %c0_i32_0 = arith.constant 0 : i32
    %c0_i32_1 = arith.constant 0 : i32
    return %c0_i32, %c0_i32_0 : i32, i32
  }
  func.func @transform_4(%arg0: i32, %arg1: i32) -> (i32, i32) {
    %c0_i32 = arith.constant 0 : i32
    %c0_i32_0 = arith.constant 0 : i32
    %c0_i32_1 = arith.constant 0 : i32
    return %c0_i32, %c0_i32_0 : i32, i32
  }
  func.func @transform_5(%arg0: i32, %arg1: i32) -> (i32, i32, i32) {
    %c0_i32 = arith.constant 0 : i32
    %c0_i32_0 = arith.constant 0 : i32
    return %arg0, %arg1, %c0_i32 : i32, i32, i32
  }
}

</mosaic_0001>

<llo_original>
// kernel: tpu_custom_call.1
$region0: #{tpu_custom_call.1}
  #allocation0 [shape = 'u32[]', space=smem, size = 0x4, offset = 0x4, fixed_abs, tag = 'smem constant byte address 0x4 - core index']
  #allocation1 [shape = 'u32[144,128]{1,0:T(1,128)}', space=vmem, size = 0x12000, scoped, tag = 'internal scratch']
  %s0 = inlined_call_operand.hbm [shape: bf16[3,16,128], index: 0, kind: input, shape index: {}]
  %s1 = inlined_call_operand.vmem [shape: f32[3,16,4], index: 1, kind: input, shape index: {}]
  %s2 = inlined_call_operand.vmem [shape: bf16[128,128], index: 2, kind: input, shape index: {}]
  %s3 = inlined_call_operand.hbm [shape: f32[4,512], index: 3, kind: input, shape index: {}]
  %s4 = inlined_call_operand.vmem [shape: f32[1,512], index: 4, kind: input, shape index: {}]
  %s5 = inlined_call_operand.hbm [shape: f32[3,16,128], index: 5, kind: output, shape index: {}]
  %s6 = sld [smem:[#allocation0]]
  $region61: #{tpu_custom_call.1} parent=0
    _
  %s8 = ssub.s32 1, %s6
  %s9 = scalar_select 0, %s8, %s6
  $region1: #{tpu_custom_call.1} parent=0
    #allocation2 [shape = 'u8[8192]{0}', space=vmem, size = 0x2000, scoped, tag = 'input window, operand 0']
    #allocation3 [shape = 's32[2]{0}', space=sflag, size = 0x8, scoped, tag = 'scoped memory for tpu_custom_call.1']
    #allocation4 [shape = 's32[2]{0}', space=sflag, size = 0x8, scoped, tag = 'scoped memory for tpu_custom_call.1']
    #allocation5 [shape = 'u8[8192]{0}', space=vmem, size = 0x2000, scoped, tag = 'input window, operand 3, single buffered']
    #allocation6 [shape = 's32[1]{0}', space=sflag, size = 0x4, scoped, tag = 'scoped memory for tpu_custom_call.1']
    #allocation7 [shape = 'u8[16384]{0}', space=vmem, size = 0x4000, scoped, tag = 'output window, operand 0']
    %10 = vsyncpa [#allocation3], 0
    %s11 = scalar_lea.sflag [#allocation3], 1
    %12 = vsyncpa %s11, 0
    %13 = vsyncpa [#allocation6], 0
    %14 = vsyncpa [#allocation4], 0
    %s15 = scalar_lea.sflag [#allocation4], 1
    %16 = vsyncpa %s15, 0
    loop: start=0, step=1, limit=5
    $region2: #{tpu_custom_call.1} parent=1 // loop_pre_header
      _
    $region3: #{tpu_custom_call.1} parent=1 // loop_header
      %s18 = sphi 0, %s22
      %p19 = scmp.ge.s32.totalorder %s18, 5
      %s25 = sphi 0, %s37
      %s26 = sphi 0, %s33
      %s27 = sphi 0, %s25
      %s28 = sphi 0, %s26
      %s29 = sphi 0, %s27
      %s30 = sphi 0, %s28
      %s42 = sphi 0, %s44
      %s45 = sphi 0, %s42
      %s46 = sphi 0, %s45
      %s62 = sphi 0, %s46
      %s70 = sphi 0, %s72
      %s73 = sphi 0, %s70
      %s74 = sphi 0, %s73
      %s90 = sphi 0, %s74
      %s94 = sphi 0, %s94
      %s96 = sphi 0, %s94
      %s97 = sphi 0, %s96
      %s111 = sphi 0, %s97
      %s115 = sphi 0, %s115
      %s117 = sphi 0, %s115
      %s118 = sphi 0, %s117
      %s132 = sphi 0, %s118
      %s136 = sphi 0, %s136
      %s138 = sphi 0, %s136
      %s139 = sphi 0, %s138
      %s153 = sphi 0, %s139
      %s161 = sphi 0, %s163
      %s164 = sphi 0, %s161
      %s165 = sphi 0, %s164
      %s181 = sphi 0, %s165
    $region4: #{tpu_custom_call.1} parent=1 // loop_header_branch
      %21 = sbr.rel (%p19) target = $region8
    $region5: #{tpu_custom_call.1} parent=1 // loop_body
      %s23 = ssub.s32 %s18, 1
      %s24 = ssub.s32 %s18, 2
      %s31 = sadd.s32 1, %s26
      %p32 = scmp.ge.s32.totalorder %s31, 1
      %s33 = scalar_select %p32, 0, %s31
      %s34 = sadd.s32 1, %s25
      %s35 = scalar_select %p32, %s34, %s25
      %p36 = scmp.ge.s32.totalorder %s35, 3
      %s37 = scalar_select %p36, 0, %s35
      %s38 = ssub.s32 %s25, %s37
      %s39 = ssub.s32 %s26, %s33
      %s40 = sor.u32 %s38, %s39
      %p41 = scmp.eq.s32.totalorder %s40, 0
      %s43 = sadd.s32 %s42, 1
      %s44 = scalar_select %p41, %s42, %s43
      %p47 = pneg %p41
      %p48 = scmp.eq.s32.totalorder %s18, 2
      %p49 = por %p47, %p48
      %p50 = scmp.ne.s32.totalorder %s42, %s45
      %p51 = scmp.eq.s32.totalorder %s18, 0
      %p52 = por %p50, %p51
      %p53 = scmp.ne.s32.totalorder %s42, %s45
      %p54 = scmp.eq.s32.totalorder %s23, 2
      %p55 = por %p53, %p54
      %p56 = scmp.ne.s32.totalorder %s45, %s46
      %p57 = scmp.eq.s32.totalorder %s23, 0
      %p58 = por %p56, %p57
      %p59 = scmp.ne.s32.totalorder %s45, %s46
      %p60 = scmp.eq.s32.totalorder %s24, 2
      %p61 = por %p59, %p60
      %p63 = scmp.ne.s32.totalorder %s46, %s62
      %p64 = scmp.eq.s32.totalorder %s24, 0
      %p65 = por %p63, %p64
      %s66 = ssub.s32 %s25, %s37
      %s67 = ssub.s32 %s26, %s33
      %s68 = sor.u32 %s66, %s67
      %p69 = scmp.eq.s32.totalorder %s68, 0
      %s71 = sadd.s32 %s70, 1
      %s72 = scalar_select %p69, %s70, %s71
      %p75 = pneg %p69
      %p76 = scmp.eq.s32.totalorder %s18, 2
      %p77 = por %p75, %p76
      %p78 = scmp.ne.s32.totalorder %s70, %s73
      %p79 = scmp.eq.s32.totalorder %s18, 0
      %p80 = por %p78, %p79
      %p81 = scmp.ne.s32.totalorder %s70, %s73
      %p82 = scmp.eq.s32.totalorder %s23, 2
      %p83 = por %p81, %p82
      %p84 = scmp.ne.s32.totalorder %s73, %s74
      %p85 = scmp.eq.s32.totalorder %s23, 0
      %p86 = por %p84, %p85
      %p87 = scmp.ne.s32.totalorder %s73, %s74
      %p88 = scmp.eq.s32.totalorder %s24, 2
      %p89 = por %p87, %p88
      %p91 = scmp.ne.s32.totalorder %s74, %s90
      %p92 = scmp.eq.s32.totalorder %s24, 0
      %p93 = por %p91, %p92
      %s95 = sadd.s32 %s94, 1
      %p98 = scmp.eq.s32.totalorder %s18, 2
      %p99 = scmp.ne.s32.totalorder %s94, %s96
      %p100 = scmp.eq.s32.totalorder %s18, 0
      %p101 = por %p99, %p100
      %p102 = scmp.ne.s32.totalorder %s94, %s96
      %p103 = scmp.eq.s32.totalorder %s23, 2
      %p104 = por %p102, %p103
      %p105 = scmp.ne.s32.totalorder %s96, %s97
      %p106 = scmp.eq.s32.totalorder %s23, 0
      %p107 = por %p105, %p106
      %p108 = scmp.ne.s32.totalorder %s96, %s97
      %p109 = scmp.eq.s32.totalorder %s24, 2
      %p110 = por %p108, %p109
      %p112 = scmp.ne.s32.totalorder %s97, %s111
      %p113 = scmp.eq.s32.totalorder %s24, 0
      %p114 = por %p112, %p113
      %s116 = sadd.s32 %s115, 1
      %p119 = scmp.eq.s32.totalorder %s18, 2
      %p120 = scmp.ne.s32.totalorder %s115, %s117
      %p121 = scmp.eq.s32.totalorder %s18, 0
      %p122 = por %p120, %p121
      %p123 = scmp.ne.s32.totalorder %s115, %s117
      %p124 = scmp.eq.s32.totalorder %s23, 2
      %p125 = por %p123, %p124
      %p126 = scmp.ne.s32.totalorder %s117, %s118
      %p127 = scmp.eq.s32.totalorder %s23, 0
      %p128 = por %p126, %p127
      %p129 = scmp.ne.s32.totalorder %s117, %s118
      %p130 = scmp.eq.s32.totalorder %s24, 2
      %p131 = por %p129, %p130
      %p133 = scmp.ne.s32.totalorder %s118, %s132
      %p134 = scmp.eq.s32.totalorder %s24, 0
      %p135 = por %p133, %p134
      %s137 = sadd.s32 %s136, 1
      %p140 = scmp.eq.s32.totalorder %s18, 2
      %p141 = scmp.ne.s32.totalorder %s136, %s138
      %p142 = scmp.eq.s32.totalorder %s18, 0
      %p143 = por %p141, %p142
      %p144 = scmp.ne.s32.totalorder %s136, %s138
      %p145 = scmp.eq.s32.totalorder %s23, 2
      %p146 = por %p144, %p145
      %p147 = scmp.ne.s32.totalorder %s138, %s139
      %p148 = scmp.eq.s32.totalorder %s23, 0
      %p149 = por %p147, %p148
      %p150 = scmp.ne.s32.totalorder %s138, %s139
      %p151 = scmp.eq.s32.totalorder %s24, 2
      %p152 = por %p150, %p151
      %p154 = scmp.ne.s32.totalorder %s139, %s153
      %p155 = scmp.eq.s32.totalorder %s24, 0
      %p156 = por %p154, %p155
      %s157 = ssub.s32 %s25, %s37
      %s158 = ssub.s32 %s26, %s33
      %s159 = sor.u32 %s157, %s158
      %p160 = scmp.eq.s32.totalorder %s159, 0
      %s162 = sadd.s32 %s161, 1
      %s163 = scalar_select %p160, %s161, %s162
      %p166 = pneg %p160
      %p167 = scmp.eq.s32.totalorder %s18, 2
      %p168 = por %p166, %p167
      %p169 = scmp.ne.s32.totalorder %s161, %s164
      %p170 = scmp.eq.s32.totalorder %s18, 0
      %p171 = por %p169, %p170
      %p172 = scmp.ne.s32.totalorder %s161, %s164
      %p173 = scmp.eq.s32.totalorder %s23, 2
      %p174 = por %p172, %p173
      %p175 = scmp.ne.s32.totalorder %s164, %s165
      %p176 = scmp.eq.s32.totalorder %s23, 0
      %p177 = por %p175, %p176
      %p178 = scmp.ne.s32.totalorder %s164, %s165
      %p179 = scmp.eq.s32.totalorder %s24, 2
      %p180 = por %p178, %p179
      %p182 = scmp.ne.s32.totalorder %s165, %s181
      %p183 = scmp.eq.s32.totalorder %s24, 0
      %p184 = por %p182, %p183
      %p185 = scmp.le.s32.totalorder 1, %s18
      %p186 = scmp.lt.s32.totalorder %s18, 4
      %p187 = pnand %p185, %p186
      %p188 = pneg %p187
      // Predicated region
      $region9: #{tpu_custom_call.1} parent=5 // pred_check
        _
      $region10: #{tpu_custom_call.1} parent=5 // pred_check_branch
        %190 = sbr.rel (%p187) target = $region12
      $region11: #{tpu_custom_call.1} parent=5 // pred_region
        %s191 = ssub.s32 %s18, 1
        // Predicated region
        $region13: #{tpu_custom_call.1} parent=11 // pred_check
          %p192 = pneg %p107
        $region14: #{tpu_custom_call.1} parent=11 // pred_check_branch
          %194 = sbr.rel (%p192) target = $region16
        $region15: #{tpu_custom_call.1} parent=11 // pred_region
          _
        $region16: #{tpu_custom_call.1} parent=11 // pred_fallthru
          _
        // Predicated region
        $region17: #{tpu_custom_call.1} parent=11 // pred_check
          %p195 = pneg %p128
        $region18: #{tpu_custom_call.1} parent=11 // pred_check_branch
          %197 = sbr.rel (%p195) target = $region20
        $region19: #{tpu_custom_call.1} parent=11 // pred_region
          %s199 = ssub.s32 256, 256
          %200 = vsyncadd [#allocation6], %s199
          %s202 = sshll.u32 [#allocation5], 4
          %s203 = int_to_ptr.vmem [resolvable:$true] %s202
          %205 = dma.hbm_to_vmem [thread:$0]  %s3, 256, %s203, [#allocation6]
        $region20: #{tpu_custom_call.1} parent=11 // pred_fallthru
          _
        // Predicated region
        $region21: #{tpu_custom_call.1} parent=11 // pred_check
          %p206 = pneg %p149
        $region22: #{tpu_custom_call.1} parent=11 // pred_check_branch
          %208 = sbr.rel (%p206) target = $region24
        $region23: #{tpu_custom_call.1} parent=11 // pred_region
          _
        $region24: #{tpu_custom_call.1} parent=11 // pred_fallthru
          _
      $region12: #{tpu_custom_call.1} parent=5 // pred_fallthru
        _
      %p209 = scmp.lt.s32.totalorder %s18, 3
      // Predicated region
      $region25: #{tpu_custom_call.1} parent=5 // pred_check
        %p210 = pneg %p209
      $region26: #{tpu_custom_call.1} parent=5 // pred_check_branch
        %212 = sbr.rel (%p210) target = $region28
      $region27: #{tpu_custom_call.1} parent=5 // pred_region
        // Predicated region
        $region29: #{tpu_custom_call.1} parent=27 // pred_check
          %p213 = pneg %p52
        $region30: #{tpu_custom_call.1} parent=27 // pred_check_branch
          %215 = sbr.rel (%p213) target = $region32
        $region31: #{tpu_custom_call.1} parent=27 // pred_region
          %s216 = sand.u32 %s42, 1
          %s217 = scalar_lea.sflag [#allocation3], %s216
          %s218 = sand.u32 %s42, 1
          %s219 = smul.addr %s218, 8
          %s220 = scalar_lea.vmem [#allocation2], %s219
          %s221 = smul.u32 2, %s26
          %s223 = ssub.s32 128, 128
          %224 = vsyncadd %s217, %s223
          %s225 = smul.addr %s25, 2
          %s226 = sadd.s32 %s221, %s225
          %s227 = smul.addr %s226, 64
          %s228 = scalar_lea.hbm %s0, %s227
          %s229 = sshll.u32 %s220, 4
          %s230 = int_to_ptr.vmem [resolvable:$true] %s229
          %235 = dma.hbm_to_vmem [thread:$0]  %s228, 128, %s230, %s217, 64, 64, 4
        $region32: #{tpu_custom_call.1} parent=27 // pred_fallthru
          _
        // Predicated region
        $region33: #{tpu_custom_call.1} parent=27 // pred_check
          %p236 = pneg %p80
        $region34: #{tpu_custom_call.1} parent=27 // pred_check_branch
          %238 = sbr.rel (%p236) target = $region36
        $region35: #{tpu_custom_call.1} parent=27 // pred_region
          %s239 = smul.u32 2, %s26
          %p240 = scmp.lt.s32.totalorder %s25, 2
          %s241 = scalar_select %p240, %s25, 2
          %p242 = scmp.lt.s32.totalorder %s239, 1
          %s243 = scalar_select %p242, %s239, 1
          %s244 = smul.addr %s241, 2
          %s245 = sadd.s32 %s243, %s244
          %s246 = smul.addr %s245, 8
          %s247 = scalar_lea.vmem %s1, %s246
          %s248 = smul.u32 2, %s26
        $region36: #{tpu_custom_call.1} parent=27 // pred_fallthru
          _
      $region28: #{tpu_custom_call.1} parent=5 // pred_fallthru
        _
      %p249 = scmp.le.s32.totalorder 1, %s18
      %p250 = scmp.lt.s32.totalorder %s18, 4
      %p251 = pnand %p249, %p250
      %p252 = pneg %p251
      // Predicated region
      $region37: #{tpu_custom_call.1} parent=5 // pred_check
        _
      $region38: #{tpu_custom_call.1} parent=5 // pred_check_branch
        %254 = sbr.rel (%p251) target = $region40
      $region39: #{tpu_custom_call.1} parent=5 // pred_region
        %s255 = ssub.s32 %s18, 1
        %s256 = sand.u32 %s45, 1
        %s257 = scalar_lea.sflag [#allocation3], %s256
        %s258 = sand.u32 %s45, 1
        %s259 = smul.addr %s258, 8
        %s260 = scalar_lea.vmem [#allocation2], %s259
        // Predicated region
        $region41: #{tpu_custom_call.1} parent=39 // pred_check
          %p261 = pneg %p58
        $region42: #{tpu_custom_call.1} parent=39 // pred_check_branch
          %263 = sbr.rel (%p261) target = $region44
        $region43: #{tpu_custom_call.1} parent=39 // pred_region
          %264 = dma.done %s257, 128
        $region44: #{tpu_custom_call.1} parent=39 // pred_fallthru
          _
        // Predicated region
        $region45: #{tpu_custom_call.1} parent=39 // pred_check
          %p265 = pneg %p128
        $region46: #{tpu_custom_call.1} parent=39 // pred_check_branch
          %267 = sbr.rel (%p265) target = $region48
        $region47: #{tpu_custom_call.1} parent=39 // pred_region
          %268 = dma.done [#allocation6], 256
        $region48: #{tpu_custom_call.1} parent=39 // pred_fallthru
          _
        %s269 = sand.u32 %s45, 1
        %s270 = scalar_lea.sflag [#allocation3], %s269
        %s271 = sand.u32 %s45, 1
        %s272 = smul.addr %s271, 8
        %s273 = scalar_lea.vmem [#allocation2], %s272
        %p274 = pneg %p58
        %p275 = pneg %p55
        %s276 = smul.u32 2, %s28
        %p277 = scmp.lt.s32.totalorder %s27, 2
        %s278 = scalar_select %p277, %s27, 2
        %p279 = scmp.lt.s32.totalorder %s276, 1
        %s280 = scalar_select %p279, %s276, 1
        %s281 = smul.addr %s278, 2
        %s282 = sadd.s32 %s280, %s281
        %s283 = smul.addr %s282, 8
        %s284 = scalar_lea.vmem %s1, %s283
        %p285 = pneg %p86
        %p286 = pneg %p83
        %p287 = pneg %p107
        %p288 = pneg %p104
        %p289 = pneg %p128
        %p290 = pneg %p125
        %p291 = pneg %p149
        %p292 = pneg %p146
        %p293 = pneg %p177
        %p294 = pneg %p174
        %s295 = sand.u32 %s164, 1
        %s296 = scalar_lea.sflag [#allocation4], %s295
        %s297 = sand.u32 %s164, 1
        %s298 = smul.addr %s297, 16
        %s299 = scalar_lea.vmem [#allocation7], %s298
        %s300 = smul.u32 2, %s28
        %s301 = smul.u32 2, %s28
        %p302 = scmp.lt.s32.totalorder %s27, 2
        %s303 = scalar_select %p302, %s27, 2
        %p304 = scmp.lt.s32.totalorder %s301, 1
        %s305 = scalar_select %p304, %s301, 1
        %s306 = smul.addr %s303, 2
        %s307 = sadd.s32 %s305, %s306
        %s308 = smul.addr %s307, 8
        %s309 = scalar_lea.vmem %s1, %s308
        %s310 = smul.u32 2, %s28
        %s311 = smul.u32 2, %s28
        %v313 = vld [vmem:[%s260] sm:$0xf]
        %v314 = vld [vmem:[%s260 + $0x4] sm:$0xf]
        %v315 = vld [vmem:[%s2] sm:$0xf]
        %v316 = vld [vmem:[%s2 + $0x4] sm:$0xf]
        %v317 = vld [vmem:[%s2 + $0x8] sm:$0xf]
        %v318 = vld [vmem:[%s2 + $0xc] sm:$0xf]
        %v319 = vld [vmem:[%s2 + $0x10] sm:$0xf]
        %v320 = vld [vmem:[%s2 + $0x14] sm:$0xf]
        %v321 = vld [vmem:[%s2 + $0x18] sm:$0xf]
        %v322 = vld [vmem:[%s2 + $0x1c] sm:$0xf]
        %v323 = vld [vmem:[%s2 + $0x20] sm:$0xf]
        %v324 = vld [vmem:[%s2 + $0x24] sm:$0xf]
        %v325 = vld [vmem:[%s2 + $0x28] sm:$0xf]
        %v326 = vld [vmem:[%s2 + $0x2c] sm:$0xf]
        %v327 = vld [vmem:[%s2 + $0x30] sm:$0xf]
        %v328 = vld [vmem:[%s2 + $0x34] sm:$0xf]
        %v329 = vld [vmem:[%s2 + $0x38] sm:$0xf]
        %v330 = vld [vmem:[%s2 + $0x3c] sm:$0xf]
        %v333 = vunpack.c.l.b16 %v313
        %v334 = vunpack.c.l.b16 %v314
        %v335 = vpack.c.b16 %v334, %v333
        %v353 = vunpack.c.l.b16 %v315
        %v354 = vunpack.c.l.b16 %v316
        %v355 = vunpack.c.l.b16 %v317
        %v356 = vunpack.c.l.b16 %v318
        %v357 = vunpack.c.l.b16 %v319
        %v358 = vunpack.c.l.b16 %v320
        %v359 = vunpack.c.l.b16 %v321
        %v360 = vunpack.c.l.b16 %v322
        %v361 = vunpack.c.l.b16 %v323
        %v362 = vunpack.c.l.b16 %v324
        %v363 = vunpack.c.l.b16 %v325
        %v364 = vunpack.c.l.b16 %v326
        %v365 = vunpack.c.l.b16 %v327
        %v366 = vunpack.c.l.b16 %v328
        %v367 = vunpack.c.l.b16 %v329
        %v368 = vunpack.c.l.b16 %v330
        %v369 = vpack.c.b16 %v354, %v353
        %v370 = vpack.c.b16 %v356, %v355
        %v371 = vpack.c.b16 %v358, %v357
        %v372 = vpack.c.b16 %v360, %v359
        %v373 = vpack.c.b16 %v362, %v361
        %v374 = vpack.c.b16 %v364, %v363
        %v375 = vpack.c.b16 %v366, %v365
        %v376 = vpack.c.b16 %v368, %v367
        %385 = vmatprep.subr.bf16.mxu0 0
        %386 = vmatpush1.bf16.msra.mxu0 %v369
        %387 = vmatprep.subr.bf16.mxu0 0
        %388 = vmatpush1.bf16.msra.mxu0 %v370
        %389 = vmatprep.subr.bf16.mxu0 0
        %390 = vmatpush1.bf16.msra.mxu0 %v371
        %391 = vmatprep.subr.bf16.mxu0 0
        %392 = vmatpush1.bf16.msra.mxu0 %v372
        %393 = vmatprep.subr.bf16.mxu0 0
        %394 = vmatpush1.bf16.msra.mxu0 %v373
        %395 = vmatprep.subr.bf16.mxu0 0
        %396 = vmatpush1.bf16.msra.mxu0 %v374
        %397 = vmatprep.subr.bf16.mxu0 0
        %398 = vmatpush1.bf16.msra.mxu0 %v375
        %399 = vmatprep.subr.bf16.mxu0 0
        %400 = vmatpush1.bf16.msra.mxu0 %v376
        %401 = vmatprep.subr.bf16.mxu0 0
        %402 = vmatpush1.bf16.msra.mxu0 0
        %403 = vmatprep.subr.bf16.mxu0 0
        %404 = vmatpush1.bf16.msra.mxu0 0
        %405 = vmatprep.subr.bf16.mxu0 0
        %406 = vmatpush1.bf16.msra.mxu0 0
        %407 = vmatprep.subr.bf16.mxu0 0
        %408 = vmatpush1.bf16.msra.mxu0 0
        %409 = vmatprep.subr.bf16.mxu0 0
        %410 = vmatpush1.bf16.msra.mxu0 0
        %411 = vmatprep.subr.bf16.mxu0 0
        %412 = vmatpush1.bf16.msra.mxu0 0
        %413 = vmatprep.subr.bf16.mxu0 0
        %414 = vmatpush1.bf16.msra.mxu0 0
        %415 = vmatprep.subr.bf16.mxu0 0
        %416 = vmatpush1.bf16.msra.mxu0 0
        %417 = vmatprep.mubr.bf16.mxu0 0
        %418 = vmatmul.mubr.bf16.gmra.mrb[0].mxu0 %v335
        %v419 = vpop.f32.mrb[0].mxu0
        %v420 = vadd.f32 0.0, %v419
        %v421 = vpop.f32.mrb[0].mxu0
        %v422 = vpop.f32.mrb[0].mxu0
        %v423 = vadd.f32 0.0, %v422
        %v424 = vpop.f32.mrb[0].mxu0
        %425 = vdwg.mxu0
        %v426 = vand.u32 2147483647, %v420
        %v427 = vand.u32 2147483647, %v423
        %v428 = vsub.f32 0.0, %v426
        %v429 = vsub.f32 0.0, %v427
        %v430 = vmul.f32 %v428, 1.442695
        %v431 = vpow.pop %v430
        %v432 = vmul.f32 %v429, 1.442695
        %v433 = vpow.pop %v432
        %v434 = vadd.f32 %v431, 1.0
        %v435 = vlog2.pop %v434
        %v436 = vmul.f32 %v435, 0.6931472
        %v437 = vmul.f32 -0.5, %v431
        %v438 = vadd.f32 %v437, 1.0
        %v439 = vmul.f32 %v438, %v431
        %v440 = vand.u32 2147483647, %v431
        %vm441 = vcmp.lt.f32.partialorder %v440, 0.0004427343
        %v442 = vsel %vm441, %v439, %v436
        %v443 = vadd.f32 %v433, 1.0
        %v444 = vlog2.pop %v443
        %v445 = vmul.f32 %v444, 0.6931472
        %v446 = vmul.f32 -0.5, %v433
        %v447 = vadd.f32 %v446, 1.0
        %v448 = vmul.f32 %v447, %v433
        %v449 = vand.u32 2147483647, %v433
        %vm450 = vcmp.lt.f32.partialorder %v449, 0.0004427343
        %v451 = vsel %vm450, %v448, %v445
        %v452 = vmax.f32 %v420, 0.0
        %v453 = vmax.f32 %v423, 0.0
        %v454 = vadd.f32 %v452, %v442
        %v455 = vadd.f32 %v453, %v451
        %v456 = vsub.f32 %v454, %v420
        %v457 = vsub.f32 %v455, %v423
        %v458 = vadd.f32 %v431, 1.0
        %v459 = vadd.f32 %v433, 1.0
        %v460 = vrcp.pop %v458
        %v461 = vrcp.pop %v459
        %vm462 = vcmp.ge.f32.partialorder %v420, 0.0
        %vm463 = vcmp.ge.f32.partialorder %v423, 0.0
        %v464 = vsub.f32 1.0, %v460
        %v465 = vsub.f32 1.0, %v461
        %v466 = vsel %vm462, %v460, %v464
        %v467 = vsel %vm463, %v461, %v465
        %v468 = vsub.f32 1.0, %v466
        %v469 = vsub.f32 1.0, %v467
        %v470 = vmul.f32 %v468, %v468
        %v471 = vmul.f32 %v469, %v469
        %v472 = vmul.f32 %v470, 0.25
        %v473 = vmul.f32 %v471, 0.25
        %v474 = vmul.f32 %v472, %v456
        %v475 = vmul.f32 %v473, %v457
        %v476 = vmul.f32 %v466, %v466
        %v477 = vmul.f32 %v467, %v467
        %v478 = vmul.f32 %v476, 0.75
        %v479 = vmul.f32 %v477, 0.75
        %v480 = vmul.f32 %v478, %v454
        %v481 = vmul.f32 %v479, %v455
        %v482 = vsub.f32 %v474, %v480
        %v483 = vsub.f32 %v475, %v481
        %v484 = vld [vmem:[%s309] sm:$0xff]
        %v485 = vld [vmem:[%s309 + $0x8] sm:$0xff]
        %v486 = vld [vmem:[#allocation5] sm:$0xff]
        %v487 = vld [vmem:[#allocation5 + $0x8] sm:$0xff]
        %v490 = vcombine.high %v486, %v486
        %v491 = vcombine.high %v487, %v487
        %vm492 = vcmask 31744
        %v494 = vsel %vm492, %v484, 0
        %v497 = vsel %vm492, %v485, 0
        %vm499 = vcmask 1043456
        %v500 = vsel %vm499, %v486, 0
        %v502 = vsel %vm499, %v490, 0
        %v504 = vsel %vm499, %v487, 0
        %v506 = vsel %vm499, %v491, 0
        %508 = vmatprep.subr.mxu0 %v502
        %509 = vmatpush1.msra.mxu0 %v500
        %510 = vmatprep.subr.mxu0 0.0
        %511 = vmatpush1.msra.mxu0 0.0
        %512 = vmatprep.subr.mxu0 0.0
        %513 = vmatpush1.msra.mxu0 0.0
        %514 = vmatprep.subr.mxu0 0.0
        %515 = vmatpush1.msra.mxu0 0.0
        %516 = vmatprep.subr.mxu0 0.0
        %517 = vmatpush1.msra.mxu0 0.0
        %518 = vmatprep.subr.mxu0 0.0
        %519 = vmatpush1.msra.mxu0 0.0
        %520 = vmatprep.subr.mxu0 0.0
        %521 = vmatpush1.msra.mxu0 0.0
        %522 = vmatprep.subr.mxu0 0.0
        %523 = vmatpush1.msra.mxu0 0.0
        %524 = vmatprep.subr.mxu0 0.0
        %525 = vmatpush1.msra.mxu0 0.0
        %526 = vmatprep.subr.mxu0 0.0
        %527 = vmatpush1.msra.mxu0 0.0
        %528 = vmatprep.subr.mxu0 0.0
        %529 = vmatpush1.msra.mxu0 0.0
        %530 = vmatprep.subr.mxu0 0.0
        %531 = vmatpush1.msra.mxu0 0.0
        %532 = vmatprep.subr.mxu0 0.0
        %533 = vmatpush1.msra.mxu0 0.0
        %534 = vmatprep.subr.mxu0 0.0
        %535 = vmatpush1.msra.mxu0 0.0
        %536 = vmatprep.subr.mxu0 0.0
        %537 = vmatpush1.msra.mxu0 0.0
        %538 = vmatprep.subr.mxu0 0.0
        %539 = vmatpush1.msra.mxu0 0.0
        %540 = vmatprep.subr.mxu0 0.0
        %541 = vmatpush1.msra.mxu0 0.0
        %542 = vmatprep.subr.mxu0 0.0
        %543 = vmatpush1.msra.mxu0 0.0
        %544 = vmatprep.subr.mxu0 0.0
        %545 = vmatpush1.msra.mxu0 0.0
        %546 = vmatprep.subr.mxu0 0.0
        %547 = vmatpush1.msra.mxu0 0.0
        %548 = vmatprep.subr.mxu0 0.0
        %549 = vmatpush1.msra.mxu0 0.0
        %550 = vmatprep.subr.mxu0 0.0
        %551 = vmatpush1.msra.mxu0 0.0
        %552 = vmatprep.subr.mxu0 0.0
        %553 = vmatpush1.msra.mxu0 0.0
        %554 = vmatprep.subr.mxu0 0.0
        %555 = vmatpush1.msra.mxu0 0.0
        %556 = vmatprep.subr.mxu0 0.0
        %557 = vmatpush1.msra.mxu0 0.0
        %558 = vmatprep.subr.mxu0 0.0
        %559 = vmatpush1.msra.mxu0 0.0
        %560 = vmatprep.subr.mxu0 0.0
        %561 = vmatpush1.msra.mxu0 0.0
        %562 = vmatprep.subr.mxu0 0.0
        %563 = vmatpush1.msra.mxu0 0.0
        %564 = vmatprep.subr.mxu0 0.0
        %565 = vmatpush1.msra.mxu0 0.0
        %566 = vmatprep.subr.mxu0 0.0
        %567 = vmatpush1.msra.mxu0 0.0
        %568 = vmatprep.subr.mxu0 0.0
        %569 = vmatpush1.msra.mxu0 0.0
        %570 = vmatprep.subr.mxu0 0.0
        %571 = vmatpush1.msra.mxu0 0.0
        %572 = vmatprep.mubr.f32.mxu0 0.0
        %573 = vmatmul.mubr.f32.gmra.mrb[0].mxu0 %v494
        %v574 = vpop.f32.mrb[0].mxu0
        %v575 = vadd.f32 0.0, %v574
        %v576 = vpop.f32.mrb[0].mxu0
        %v577 = vadd.f32 0.0, %v576
        %578 = vmatprep.mubr.f32.mxu0 0.0
        %579 = vmatmul.mubr.f32.gmra.mrb[0].mxu0 %v497
        %v580 = vpop.f32.mrb[0].mxu0
        %v581 = vadd.f32 0.0, %v580
        %v582 = vpop.f32.mrb[0].mxu0
        %v583 = vadd.f32 0.0, %v582
        %584 = vdwg.mxu0
        %585 = vmatprep.subr.mxu0 %v506
        %586 = vmatpush1.msra.mxu0 %v504
        %587 = vmatprep.subr.mxu0 0.0
        %588 = vmatpush1.msra.mxu0 0.0
        %589 = vmatprep.subr.mxu0 0.0
        %590 = vmatpush1.msra.mxu0 0.0
        %591 = vmatprep.subr.mxu0 0.0
        %592 = vmatpush1.msra.mxu0 0.0
        %593 = vmatprep.subr.mxu0 0.0
        %594 = vmatpush1.msra.mxu0 0.0
        %595 = vmatprep.subr.mxu0 0.0
        %596 = vmatpush1.msra.mxu0 0.0
        %597 = vmatprep.subr.mxu0 0.0
        %598 = vmatpush1.msra.mxu0 0.0
        %599 = vmatprep.subr.mxu0 0.0
        %600 = vmatpush1.msra.mxu0 0.0
        %601 = vmatprep.subr.mxu0 0.0
        %602 = vmatpush1.msra.mxu0 0.0
        %603 = vmatprep.subr.mxu0 0.0
        %604 = vmatpush1.msra.mxu0 0.0
        %605 = vmatprep.subr.mxu0 0.0
        %606 = vmatpush1.msra.mxu0 0.0
        %607 = vmatprep.subr.mxu0 0.0
        %608 = vmatpush1.msra.mxu0 0.0
        %609 = vmatprep.subr.mxu0 0.0
        %610 = vmatpush1.msra.mxu0 0.0
        %611 = vmatprep.subr.mxu0 0.0
        %612 = vmatpush1.msra.mxu0 0.0
        %613 = vmatprep.subr.mxu0 0.0
        %614 = vmatpush1.msra.mxu0 0.0
        %615 = vmatprep.subr.mxu0 0.0
        %616 = vmatpush1.msra.mxu0 0.0
        %617 = vmatprep.subr.mxu0 0.0
        %618 = vmatpush1.msra.mxu0 0.0
        %619 = vmatprep.subr.mxu0 0.0
        %620 = vmatpush1.msra.mxu0 0.0
        %621 = vmatprep.subr.mxu0 0.0
        %622 = vmatpush1.msra.mxu0 0.0
        %623 = vmatprep.subr.mxu0 0.0
        %624 = vmatpush1.msra.mxu0 0.0
        %625 = vmatprep.subr.mxu0 0.0
        %626 = vmatpush1.msra.mxu0 0.0
        %627 = vmatprep.subr.mxu0 0.0
        %628 = vmatpush1.msra.mxu0 0.0
        %629 = vmatprep.subr.mxu0 0.0
        %630 = vmatpush1.msra.mxu0 0.0
        %631 = vmatprep.subr.mxu0 0.0
        %632 = vmatpush1.msra.mxu0 0.0
        %633 = vmatprep.subr.mxu0 0.0
        %634 = vmatpush1.msra.mxu0 0.0
        %635 = vmatprep.subr.mxu0 0.0
        %636 = vmatpush1.msra.mxu0 0.0
        %637 = vmatprep.subr.mxu0 0.0
        %638 = vmatpush1.msra.mxu0 0.0
        %639 = vmatprep.subr.mxu0 0.0
        %640 = vmatpush1.msra.mxu0 0.0
        %641 = vmatprep.subr.mxu0 0.0
        %642 = vmatpush1.msra.mxu0 0.0
        %643 = vmatprep.subr.mxu0 0.0
        %644 = vmatpush1.msra.mxu0 0.0
        %645 = vmatprep.subr.mxu0 0.0
        %646 = vmatpush1.msra.mxu0 0.0
        %647 = vmatprep.subr.mxu0 0.0
        %648 = vmatpush1.msra.mxu0 0.0
        %649 = vmatprep.mubr.f32.mxu0 0.0
        %650 = vmatmul.mubr.f32.gmra.mrb[0].mxu0 %v494
        %v651 = vpop.f32.mrb[0].mxu0
        %v652 = vadd.f32 0.0, %v651
        %v653 = vpop.f32.mrb[0].mxu0
        %v654 = vadd.f32 0.0, %v653
        %655 = vmatprep.mubr.f32.mxu0 0.0
        %656 = vmatmul.mubr.f32.gmra.mrb[0].mxu0 %v497
        %v657 = vpop.f32.mrb[0].mxu0
        %v658 = vadd.f32 0.0, %v657
        %v659 = vpop.f32.mrb[0].mxu0
        %v660 = vadd.f32 0.0, %v659
        %661 = vdwg.mxu0
        %v662 = vld [vmem:[%s4] sm:$0xf]
        %v664 = vlaneseq
        %v665 = vshrl.u32 %v664, 7
        %v666 = vsub.s32 0, %v665
        %v667 = vrot.slane %v662, %v666
        %v668 = vlaneseq
        %v669 = vshrl.u32 %v668, 7
        %v670 = vsub.s32 1, %v669
        %v671 = vrot.slane %v662, %v670
        %v672 = vlaneseq
        %v673 = vshrl.u32 %v672, 7
        %v674 = vsub.s32 2, %v673
        %v675 = vrot.slane %v662, %v674
        %v676 = vlaneseq
        %v677 = vshrl.u32 %v676, 7
        %v678 = vsub.s32 3, %v677
        %v679 = vrot.slane %v662, %v678
        %v684 = vsub.f32 %v575, %v667
        %v685 = vsub.f32 %v577, %v671
        %v686 = vsub.f32 %v652, %v675
        %v687 = vsub.f32 %v654, %v679
        %v688 = vsub.f32 %v581, %v667
        %v689 = vsub.f32 %v583, %v671
        %v690 = vsub.f32 %v658, %v675
        %v691 = vsub.f32 %v660, %v679
        %v692 = vand.u32 2147483647, %v684
        %v693 = vand.u32 2147483647, %v685
        %v694 = vand.u32 2147483647, %v686
        %v695 = vand.u32 2147483647, %v687
        %v696 = vand.u32 2147483647, %v688
        %v697 = vand.u32 2147483647, %v689
        %v698 = vand.u32 2147483647, %v690
        %v699 = vand.u32 2147483647, %v691
        %v700 = vadd.f32 %v692, %v693
        %v701 = vadd.f32 %v696, %v697
        %v702 = vadd.f32 %v700, %v694
        %v703 = vadd.f32 %v701, %v698
        %v704 = vadd.f32 %v702, %v695
        %v705 = vadd.f32 %v703, %v699
        %v706 = vadd.f32 %v482, %v704
        %v707 = vadd.f32 %v483, %v705
        %708 = vst [vmem:[%s299] sm:$0xff] %v706
        %709 = vst [vmem:[%s299 + $0x8] sm:$0xff] %v707
        %s710 = sand.u32 %s164, 1
        %s711 = scalar_lea.sflag [#allocation4], %s710
        %s712 = sand.u32 %s164, 1
        %s713 = smul.addr %s712, 16
        %s714 = scalar_lea.vmem [#allocation7], %s713
        // Predicated region
        $region49: #{tpu_custom_call.1} parent=39 // pred_check
          %p715 = pneg %p174
        $region50: #{tpu_custom_call.1} parent=39 // pred_check_branch
          %717 = sbr.rel (%p715) target = $region52
        $region51: #{tpu_custom_call.1} parent=39 // pred_region
          %s718 = smul.u32 2, %s28
          %s720 = ssub.s32 256, 256
          %721 = vsyncadd %s711, %s720
          %s722 = smul.addr %s27, 2
          %s723 = sadd.s32 %s718, %s722
          %s724 = smul.addr %s723, 128
          %s725 = scalar_lea.hbm %s5, %s724
          %s726 = sshll.u32 %s714, 4
          %s727 = int_to_ptr.vmem [resolvable:$true] %s726
          %732 = dma.vmem_to_hbm [thread:$0]  %s727, 256, %s725, %s711, 128, 128, 8
        $region52: #{tpu_custom_call.1} parent=39 // pred_fallthru
          _
      $region40: #{tpu_custom_call.1} parent=5 // pred_fallthru
        _
      %p733 = scmp.le.s32.totalorder 2, %s18
      // Predicated region
      $region53: #{tpu_custom_call.1} parent=5 // pred_check
        %p734 = pneg %p733
      $region54: #{tpu_custom_call.1} parent=5 // pred_check_branch
        %736 = sbr.rel (%p734) target = $region56
      $region55: #{tpu_custom_call.1} parent=5 // pred_region
        %s737 = ssub.s32 %s18, 2
        // Predicated region
        $region57: #{tpu_custom_call.1} parent=55 // pred_check
          %p738 = pneg %p180
        $region58: #{tpu_custom_call.1} parent=55 // pred_check_branch
          %740 = sbr.rel (%p738) target = $region60
        $region59: #{tpu_custom_call.1} parent=55 // pred_region
          %s741 = sand.u32 %s165, 1
          %s742 = scalar_lea.sflag [#allocation4], %s741
          %s743 = sand.u32 %s165, 1
          %s744 = smul.addr %s743, 16
          %s745 = scalar_lea.vmem [#allocation7], %s744
          %746 = dma.done %s742, 256
        $region60: #{tpu_custom_call.1} parent=55 // pred_fallthru
          _
      $region56: #{tpu_custom_call.1} parent=5 // pred_fallthru
        _
    $region6: #{tpu_custom_call.1} parent=1 // loop_footer
      %s22 = sadd.s32 1, %s18
    $region7: #{tpu_custom_call.1} parent=1 // loop_footer_branch
      %17 = sbr.rel target = $region3
    $region8: #{tpu_custom_call.1} parent=1 // loop_exit
      _
    %747 = vsyncpa [#allocation3], 1
    %s748 = scalar_lea.sflag [#allocation3], 1
    %749 = vsyncpa %s748, 1
    %750 = vsyncpa [#allocation6], 1
    %751 = vsyncpa [#allocation4], 1
    %s752 = scalar_lea.sflag [#allocation4], 1
    %753 = vsyncpa %s752, 1

</llo_original>
